<compile_context>
chip_gen: v7x
topology: tpu7x:2x2x1
jax: 0.10.0
libtpu: 0.0.40
codegen_flags: <defaults>
</compile_context>

<pallas_src>
import jax
import jax.numpy as jnp
from jax.experimental import pallas as pl
from jax.experimental.pallas import tpu as pltpu
from types import SimpleNamespace


_DEFAULT_ROW_TILE = 512            # rows per grid step (multiple of 16)
_VMEM_LIMIT_BYTES = 32 * 1024 * 1024


def _round_up(x, m):
    return ((x + m - 1) // m) * m


# ---------------------------------------------------------------------------
# Kernels (entire Linear chain fused; everything stays in VMEM/vregs)
# ---------------------------------------------------------------------------

def _linear(x, w_ref, b_ref):
    return jnp.dot(x, w_ref[...], preferred_element_type=jnp.float32) + b_ref[...]


def _trunk(x_ref, w1, b1, w2, b2, w3, b3, w4, b4):
    x = x_ref[...].astype(jnp.float32)            # bf16 -> f32 (f32 accumulation)
    # inp_processor: Linear -> ReLU -> Linear
    h = jnp.maximum(_linear(x, w1, b1), 0.0)
    h = _linear(h, w2, b2)
    # state_processor: Linear -> ReLU -> Linear
    h = jnp.maximum(_linear(h, w3, b3), 0.0)
    return _linear(h, w4, b4)


def _discrete_kernel(x_ref, w1, b1, w2, b2, w3, b3, w4, b4,
                     w5, b5, w6, b6, o_ref):
    n_out = _trunk(x_ref, w1, b1, w2, b2, w3, b3, w4, b4)
    # logit_net: Linear -> ReLU -> Linear
    h = jnp.maximum(_linear(n_out, w5, b5), 0.0)
    o_ref[...] = _linear(h, w6, b6).astype(o_ref.dtype)


def _softplus(x):
    # numerically stable softplus using only exp/log (EUP ops)
    return jnp.maximum(x, 0.0) + jnp.log(1.0 + jnp.exp(-jnp.abs(x)))


def _continuous_kernel(x_ref, w1, b1, w2, b2, w3, b3, w4, b4,
                       wm1, bm1, wm2, bm2, wv1, bv1, wv2, bv2,
                       mean_ref, var_ref):
    n_out = _trunk(x_ref, w1, b1, w2, b2, w3, b3, w4, b4)
    hm = jnp.maximum(_linear(n_out, wm1, bm1), 0.0)
    mean_ref[...] = _linear(hm, wm2, bm2).astype(mean_ref.dtype)
    hv = jnp.maximum(_linear(n_out, wv1, bv1), 0.0)
    var_ref[...] = _softplus(_linear(hv, wv2, bv2)).astype(var_ref.dtype)


# ---------------------------------------------------------------------------
# pallas_call wrapper: row-tiled grid, resident weights, cost estimate
# ---------------------------------------------------------------------------

def _fused_mlp_call(kernel, x2d, params, out_dims, *,
                    row_tile=_DEFAULT_ROW_TILE,
                    compute_dtype=jnp.bfloat16,
                    transcendentals_per_row=0):
    n, d_in = x2d.shape

    # Row tile: multiple of 16 (valid sublane tiling for f32 and bf16); pad the
    # flattened rows so every grid step sees a full tile (no masked tail tile).
    tm = min(row_tile, _round_up(max(n, 16), 16))
    n_pad = _round_up(n, tm)
    x2d = x2d.astype(compute_dtype)
    if n_pad != n:
        x2d = jnp.pad(x2d, ((0, n_pad - n), (0, 0)))

    grid = (n_pad // tm,)

    def row_spec(feat):
        return pl.BlockSpec((tm, feat), lambda i: (i, 0))

    def resident_spec(p):                       # weights stay put across steps
        return pl.BlockSpec(p.shape, lambda i: (0,) * p.ndim)

    in_specs = [row_spec(d_in)] + [resident_spec(p) for p in params]
    out_specs = tuple(row_spec(d) for d in out_dims)
    out_shape = tuple(jax.ShapeDtypeStruct((n_pad, d), jnp.float32)
                      for d in out_dims)

    # Advisory cost estimate (params is flat [w1, b1, w2, b2, ...]).
    matmul_flops = sum(2 * n_pad * w.shape[0] * w.shape[1] for w in params[0::2])
    bytes_accessed = (x2d.size * x2d.dtype.itemsize
                      + sum(int(p.size) * p.dtype.itemsize for p in params)
                      + sum(n_pad * d * 4 for d in out_dims))
    cost = pl.CostEstimate(flops=matmul_flops,
                           transcendentals=transcendentals_per_row * n_pad,
                           bytes_accessed=bytes_accessed)

    outs = pl.pallas_call(
        kernel,
        grid=grid,
        in_specs=in_specs,
        out_specs=out_specs,
        out_shape=out_shape,
        compiler_params=pltpu.CompilerParams(
            dimension_semantics=("parallel",),       # v7x: shard rows over 2 TCs
            vmem_limit_bytes=_VMEM_LIMIT_BYTES),
        cost_estimate=cost,
    )(x2d, *params)

    return tuple(o[:n] for o in outs)


# ---------------------------------------------------------------------------
# Module wrapper (parameter setup + concat/reshape glue in plain JAX)
# ---------------------------------------------------------------------------

class ProposalActionPredictionNetPallas:
    def __init__(self, o_enc_dim, action_encoding, s_dim, h_dim, mid_dim,
                 gnn_hdim1, gnn_hdim2, gnn_out_dim, act_dim, action_type, key,
                 row_tile=_DEFAULT_ROW_TILE, compute_dtype=jnp.bfloat16):
        # gnn_hdim2 kept for signature parity with the torch module (unused there too).
        del gnn_hdim2
        self.action_type = action_type
        self.act_dim = act_dim
        self.row_tile = row_tile
        self.compute_dtype = compute_dtype
        in_dim = s_dim + h_dim + o_enc_dim + action_encoding + 1

        def init_linear(k, fan_in, fan_out):
            kw, kb = jax.random.split(k)
            lim = float(fan_in) ** -0.5
            w = jax.random.uniform(kw, (fan_in, fan_out), jnp.float32, -lim, lim)
            b = jax.random.uniform(kb, (1, fan_out), jnp.float32, -lim, lim)
            return w, b

        keys = jax.random.split(key, 8)
        w1, b1 = init_linear(keys[0], in_dim, mid_dim)        # inp_processor
        w2, b2 = init_linear(keys[1], mid_dim, mid_dim)
        w3, b3 = init_linear(keys[2], mid_dim, gnn_hdim1)     # state_processor
        w4, b4 = init_linear(keys[3], gnn_hdim1, gnn_out_dim)
        self.trunk = [w1, b1, w2, b2, w3, b3, w4, b4]
        if action_type == 'continuous':
            wm1, bm1 = init_linear(keys[4], gnn_out_dim, gnn_out_dim)
            wm2, bm2 = init_linear(keys[5], gnn_out_dim, act_dim)
            wv1, bv1 = init_linear(keys[6], gnn_out_dim, gnn_out_dim)
            wv2, bv2 = init_linear(keys[7], gnn_out_dim, act_dim)
            self.heads = [wm1, bm1, wm2, bm2, wv1, bv1, wv2, bv2]
        else:
            w5, b5 = init_linear(keys[4], gnn_out_dim, gnn_out_dim)
            w6, b6 = init_linear(keys[5], gnn_out_dim, act_dim)
            self.heads = [w5, b5, w6, b6]

    def __call__(self, observation_states, previous_latent_state):
        input_h = previous_latent_state.theta
        input_s = previous_latent_state.s
        input_i = previous_latent_state.i
        input_obs = observation_states.all_phi_x
        input_act = observation_states.encoded_action
        batch, particles, agents = input_h.shape[:3]

        # concat + flatten (cheap XLA glue; feeds one fused Pallas kernel)
        x = jnp.concatenate([input_h, input_s, input_i, input_obs, input_act],
                            axis=-1)
        x2d = x.reshape(-1, x.shape[-1])
        params = self.trunk + self.heads

        if self.action_type == 'continuous':
            mean, var = _fused_mlp_call(
                _continuous_kernel, x2d, params, (self.act_dim, self.act_dim),
                row_tile=self.row_tile, compute_dtype=self.compute_dtype,
                transcendentals_per_row=2 * self.act_dim)
            return (mean.reshape(batch, particles, agents, -1),
                    var.reshape(batch, particles, agents, -1))

        (logits,) = _fused_mlp_call(
            _discrete_kernel, x2d, params, (self.act_dim,),
            row_tile=self.row_tile, compute_dtype=self.compute_dtype)
        return logits.reshape(batch, particles, agents, -1)


# ---------------------------------------------------------------------------
# Plain-JAX reference (same bf16 input rounding, high-precision matmuls)
# ---------------------------------------------------------------------------

def _ref_forward(model, observation_states, previous_latent_state):
    hp = jax.lax.Precision.HIGHEST
    x = jnp.concatenate([previous_latent_state.theta, previous_latent_state.s,
                         previous_latent_state.i, observation_states.all_phi_x,
                         observation_states.encoded_action], axis=-1)
    b, p, a = x.shape[:3]
    x = x.reshape(-1, x.shape[-1]).astype(model.compute_dtype).astype(jnp.float32)

    def lin(v, w, bb):
        return jnp.dot(v, w, precision=hp) + bb

    w1, b1, w2, b2, w3, b3, w4, b4 = model.trunk
    h = jnp.maximum(lin(x, w1, b1), 0.0)
    h = lin(h, w2, b2)
    h = jnp.maximum(lin(h, w3, b3), 0.0)
    n_out = lin(h, w4, b4)
    if model.action_type == 'continuous':
        wm1, bm1, wm2, bm2, wv1, bv1, wv2, bv2 = model.heads
        mean = lin(jnp.maximum(lin(n_out, wm1, bm1), 0.0), wm2, bm2)
        var = jax.nn.softplus(lin(jnp.maximum(lin(n_out, wv1, bv1), 0.0), wv2, bv2))
        return mean.reshape(b, p, a, -1), var.reshape(b, p, a, -1)
    w5, b5, w6, b6 = model.heads
    logits = lin(jnp.maximum(lin(n_out, w5, b5), 0.0), w6, b6)
    return logits.reshape(b, p, a, -1)


if __name__ == "__main__":
    key = jax.random.PRNGKey(0)
    kp, kd = jax.random.split(key)

    # Small shapes consistent with the module's forward pass.
    batch, particles, agents = 2, 4, 4
    o_enc_dim, action_encoding = 32, 16
    s_dim, h_dim = 16, 8
    mid_dim, gnn_hdim1, gnn_hdim2, gnn_out_dim = 32, 32, 32, 32
    act_dim = 6

    kh, ks, ki, ko, ka, kc = jax.random.split(kd, 6)
    latent = SimpleNamespace(
        theta=jax.random.normal(kh, (batch, particles, agents, h_dim), jnp.float32),
        s=jax.random.normal(ks, (batch, particles, agents, s_dim), jnp.float32),
        i=jax.random.normal(ki, (batch, particles, agents, 1), jnp.float32),
    )
    obs = SimpleNamespace(
        all_phi_x=jax.random.normal(
            ko, (batch, particles, agents, o_enc_dim), jnp.float32),
        encoded_action=jax.random.normal(
            ka, (batch, particles, agents, action_encoding), jnp.float32),
    )

    k_disc, k_cont = jax.random.split(kc)

    # --- discrete head -------------------------------------------------------
    disc = ProposalActionPredictionNetPallas(
        o_enc_dim, action_encoding, s_dim, h_dim, mid_dim,
        gnn_hdim1, gnn_hdim2, gnn_out_dim, act_dim, 'discrete', k_disc)
    logits = disc(obs, latent)
    jax.block_until_ready(logits)
    ref_logits = _ref_forward(disc, obs, latent)
    assert logits.shape == (batch, particles, agents, act_dim)
    assert jnp.allclose(logits, ref_logits, atol=2e-2, rtol=2e-2), \
        float(jnp.max(jnp.abs(logits - ref_logits)))

    # --- continuous head -----------------------------------------------------
    cont = ProposalActionPredictionNetPallas(
        o_enc_dim, action_encoding, s_dim, h_dim, mid_dim,
        gnn_hdim1, gnn_hdim2, gnn_out_dim, act_dim, 'continuous', k_cont)
    mean, var = cont(obs, latent)
    jax.block_until_ready((mean, var))
    ref_mean, ref_var = _ref_forward(cont, obs, latent)
    assert mean.shape == (batch, particles, agents, act_dim)
    assert var.shape == (batch, particles, agents, act_dim)
    assert bool(jnp.all(var >= 0.0))
    assert jnp.allclose(mean, ref_mean, atol=2e-2, rtol=2e-2)
    assert jnp.allclose(var, ref_var, atol=2e-2, rtol=2e-2)

    print("KERNEL_OK")
</pallas_src>

<mosaic_0001>
module attributes {stable_mosaic.version = 11 : i64} {
  func.func @_discrete_kernel(%arg0: i32, %arg1: memref<32x73xbf16, #tpu.memory_space<vmem>>, %arg2: memref<73x32xf32, #tpu.memory_space<vmem>>, %arg3: memref<1x32xf32, #tpu.memory_space<vmem>>, %arg4: memref<32x32xf32, #tpu.memory_space<vmem>>, %arg5: memref<1x32xf32, #tpu.memory_space<vmem>>, %arg6: memref<32x32xf32, #tpu.memory_space<vmem>>, %arg7: memref<1x32xf32, #tpu.memory_space<vmem>>, %arg8: memref<32x32xf32, #tpu.memory_space<vmem>>, %arg9: memref<1x32xf32, #tpu.memory_space<vmem>>, %arg10: memref<32x32xf32, #tpu.memory_space<vmem>>, %arg11: memref<1x32xf32, #tpu.memory_space<vmem>>, %arg12: memref<32x6xf32, #tpu.memory_space<vmem>>, %arg13: memref<1x6xf32, #tpu.memory_space<vmem>>, %arg14: memref<32x6xf32, #tpu.memory_space<vmem>>) attributes {dimension_semantics = [#tpu.dimension_semantics<parallel>], iteration_bounds = array<i64: 1>, scalar_prefetch = 0 : i64, scratch_operands = 0 : i64, tpu.core_type = #tpu.core_type<tc>, window_params = [{transform_indices = @transform_0, window_bounds = array<i64: 32, 73>}, {pipeline_mode = #tpu.pipeline_mode<synchronous>, transform_indices = @transform_1, window_bounds = array<i64: 73, 32>}, {pipeline_mode = #tpu.pipeline_mode<synchronous>, transform_indices = @transform_2, window_bounds = array<i64: 1, 32>}, {pipeline_mode = #tpu.pipeline_mode<synchronous>, transform_indices = @transform_3, window_bounds = array<i64: 32, 32>}, {pipeline_mode = #tpu.pipeline_mode<synchronous>, transform_indices = @transform_4, window_bounds = array<i64: 1, 32>}, {pipeline_mode = #tpu.pipeline_mode<synchronous>, transform_indices = @transform_5, window_bounds = array<i64: 32, 32>}, {pipeline_mode = #tpu.pipeline_mode<synchronous>, transform_indices = @transform_6, window_bounds = array<i64: 1, 32>}, {pipeline_mode = #tpu.pipeline_mode<synchronous>, transform_indices = @transform_7, window_bounds = array<i64: 32, 32>}, {pipeline_mode = #tpu.pipeline_mode<synchronous>, transform_indices = @transform_8, window_bounds = array<i64: 1, 32>}, {pipeline_mode = #tpu.pipeline_mode<synchronous>, transform_indices = @transform_9, window_bounds = array<i64: 32, 32>}, {pipeline_mode = #tpu.pipeline_mode<synchronous>, transform_indices = @transform_10, window_bounds = array<i64: 1, 32>}, {pipeline_mode = #tpu.pipeline_mode<synchronous>, transform_indices = @transform_11, window_bounds = array<i64: 32, 6>}, {pipeline_mode = #tpu.pipeline_mode<synchronous>, transform_indices = @transform_12, window_bounds = array<i64: 1, 6>}, {transform_indices = @transform_13, window_bounds = array<i64: 32, 6>}]} {
    %c0 = arith.constant 0 : index
    %c0_0 = arith.constant 0 : index
    %0 = vector.load %arg1[%c0, %c0_0] : memref<32x73xbf16, #tpu.memory_space<vmem>>, vector<32x73xbf16>
    %1 = arith.extf %0 : vector<32x73xbf16> to vector<32x73xf32>
    %c0_1 = arith.constant 0 : index
    %c0_2 = arith.constant 0 : index
    %2 = vector.load %arg2[%c0_1, %c0_2] : memref<73x32xf32, #tpu.memory_space<vmem>>, vector<73x32xf32>
    %cst = arith.constant dense<0.000000e+00> : vector<32x32xf32>
    %3 = tpu.matmul %1, %2, %cst {dimension_numbers = #tpu.dot_dimension_numbers<[1], [0], [0], [1], [0, 0, 1, 1], [], []>} : vector<32x73xf32>, vector<73x32xf32>, vector<32x32xf32> -> vector<32x32xf32>
    %c0_3 = arith.constant 0 : index
    %c0_4 = arith.constant 0 : index
    %4 = vector.load %arg3[%c0_3, %c0_4] : memref<1x32xf32, #tpu.memory_space<vmem>>, vector<1x32xf32>
    %5 = vector.broadcast %4 : vector<1x32xf32> to vector<32x32xf32>
    %6 = arith.addf %3, %5 : vector<32x32xf32>
    %cst_5 = arith.constant 0.000000e+00 : f32
    %7 = vector.broadcast %cst_5 : f32 to vector<32x32xf32>
    %8 = arith.maximumf %6, %7 : vector<32x32xf32>
    %c0_6 = arith.constant 0 : index
    %c0_7 = arith.constant 0 : index
    %9 = vector.load %arg4[%c0_6, %c0_7] : memref<32x32xf32, #tpu.memory_space<vmem>>, vector<32x32xf32>
    %cst_8 = arith.constant dense<0.000000e+00> : vector<32x32xf32>
    %10 = tpu.matmul %8, %9, %cst_8 {dimension_numbers = #tpu.dot_dimension_numbers<[1], [0], [0], [1], [0, 0, 1, 1], [], []>} : vector<32x32xf32>, vector<32x32xf32>, vector<32x32xf32> -> vector<32x32xf32>
    %c0_9 = arith.constant 0 : index
    %c0_10 = arith.constant 0 : index
    %11 = vector.load %arg5[%c0_9, %c0_10] : memref<1x32xf32, #tpu.memory_space<vmem>>, vector<1x32xf32>
    %12 = vector.broadcast %11 : vector<1x32xf32> to vector<32x32xf32>
    %13 = arith.addf %10, %12 : vector<32x32xf32>
    %c0_11 = arith.constant 0 : index
    %c0_12 = arith.constant 0 : index
    %14 = vector.load %arg6[%c0_11, %c0_12] : memref<32x32xf32, #tpu.memory_space<vmem>>, vector<32x32xf32>
    %cst_13 = arith.constant dense<0.000000e+00> : vector<32x32xf32>
    %15 = tpu.matmul %13, %14, %cst_13 {dimension_numbers = #tpu.dot_dimension_numbers<[1], [0], [0], [1], [0, 0, 1, 1], [], []>} : vector<32x32xf32>, vector<32x32xf32>, vector<32x32xf32> -> vector<32x32xf32>
    %c0_14 = arith.constant 0 : index
    %c0_15 = arith.constant 0 : index
    %16 = vector.load %arg7[%c0_14, %c0_15] : memref<1x32xf32, #tpu.memory_space<vmem>>, vector<1x32xf32>
    %17 = vector.broadcast %16 : vector<1x32xf32> to vector<32x32xf32>
    %18 = arith.addf %15, %17 : vector<32x32xf32>
    %cst_16 = arith.constant 0.000000e+00 : f32
    %19 = vector.broadcast %cst_16 : f32 to vector<32x32xf32>
    %20 = arith.maximumf %18, %19 : vector<32x32xf32>
    %c0_17 = arith.constant 0 : index
    %c0_18 = arith.constant 0 : index
    %21 = vector.load %arg8[%c0_17, %c0_18] : memref<32x32xf32, #tpu.memory_space<vmem>>, vector<32x32xf32>
    %cst_19 = arith.constant dense<0.000000e+00> : vector<32x32xf32>
    %22 = tpu.matmul %20, %21, %cst_19 {dimension_numbers = #tpu.dot_dimension_numbers<[1], [0], [0], [1], [0, 0, 1, 1], [], []>} : vector<32x32xf32>, vector<32x32xf32>, vector<32x32xf32> -> vector<32x32xf32>
    %c0_20 = arith.constant 0 : index
    %c0_21 = arith.constant 0 : index
    %23 = vector.load %arg9[%c0_20, %c0_21] : memref<1x32xf32, #tpu.memory_space<vmem>>, vector<1x32xf32>
    %24 = vector.broadcast %23 : vector<1x32xf32> to vector<32x32xf32>
    %25 = arith.addf %22, %24 : vector<32x32xf32>
    %c0_22 = arith.constant 0 : index
    %c0_23 = arith.constant 0 : index
    %26 = vector.load %arg10[%c0_22, %c0_23] : memref<32x32xf32, #tpu.memory_space<vmem>>, vector<32x32xf32>
    %cst_24 = arith.constant dense<0.000000e+00> : vector<32x32xf32>
    %27 = tpu.matmul %25, %26, %cst_24 {dimension_numbers = #tpu.dot_dimension_numbers<[1], [0], [0], [1], [0, 0, 1, 1], [], []>} : vector<32x32xf32>, vector<32x32xf32>, vector<32x32xf32> -> vector<32x32xf32>
    %c0_25 = arith.constant 0 : index
    %c0_26 = arith.constant 0 : index
    %28 = vector.load %arg11[%c0_25, %c0_26] : memref<1x32xf32, #tpu.memory_space<vmem>>, vector<1x32xf32>
    %29 = vector.broadcast %28 : vector<1x32xf32> to vector<32x32xf32>
    %30 = arith.addf %27, %29 : vector<32x32xf32>
    %cst_27 = arith.constant 0.000000e+00 : f32
    %31 = vector.broadcast %cst_27 : f32 to vector<32x32xf32>
    %32 = arith.maximumf %30, %31 : vector<32x32xf32>
    %c0_28 = arith.constant 0 : index
    %c0_29 = arith.constant 0 : index
    %33 = vector.load %arg12[%c0_28, %c0_29] : memref<32x6xf32, #tpu.memory_space<vmem>>, vector<32x6xf32>
    %cst_30 = arith.constant dense<0.000000e+00> : vector<32x6xf32>
    %34 = tpu.matmul %32, %33, %cst_30 {dimension_numbers = #tpu.dot_dimension_numbers<[1], [0], [0], [1], [0, 0, 1, 1], [], []>} : vector<32x32xf32>, vector<32x6xf32>, vector<32x6xf32> -> vector<32x6xf32>
    %c0_31 = arith.constant 0 : index
    %c0_32 = arith.constant 0 : index
    %35 = vector.load %arg13[%c0_31, %c0_32] : memref<1x6xf32, #tpu.memory_space<vmem>>, vector<1x6xf32>
    %36 = vector.broadcast %35 : vector<1x6xf32> to vector<32x6xf32>
    %37 = arith.addf %34, %36 : vector<32x6xf32>
    %c0_33 = arith.constant 0 : index
    %c0_34 = arith.constant 0 : index
    %38 = vector.load %arg14[%c0_33, %c0_34] : memref<32x6xf32, #tpu.memory_space<vmem>>, vector<32x6xf32>
    tpu.vector_store %arg14[%c0_33, %c0_34], %37 {strides = array<i32>} : memref<32x6xf32, #tpu.memory_space<vmem>>, vector<32x6xf32>,
    return
  }
  func.func @transform_0(%arg0: i32) -> (i32, i32) {
    %c0_i32 = arith.constant 0 : i32
    %c0_i32_0 = arith.constant 0 : i32
    return %arg0, %c0_i32 : i32, i32
  }
  func.func @transform_1(%arg0: i32) -> (i32, i32) {
    %c0_i32 = arith.constant 0 : i32
    %c0_i32_0 = arith.constant 0 : i32
    %c0_i32_1 = arith.constant 0 : i32
    return %c0_i32, %c0_i32_0 : i32, i32
  }
  func.func @transform_2(%arg0: i32) -> (i32, i32) {
    %c0_i32 = arith.constant 0 : i32
    %c0_i32_0 = arith.constant 0 : i32
    %c0_i32_1 = arith.constant 0 : i32
    return %c0_i32, %c0_i32_0 : i32, i32
  }
  func.func @transform_3(%arg0: i32) -> (i32, i32) {
    %c0_i32 = arith.constant 0 : i32
    %c0_i32_0 = arith.constant 0 : i32
    %c0_i32_1 = arith.constant 0 : i32
    return %c0_i32, %c0_i32_0 : i32, i32
  }
  func.func @transform_4(%arg0: i32) -> (i32, i32) {
    %c0_i32 = arith.constant 0 : i32
    %c0_i32_0 = arith.constant 0 : i32
    %c0_i32_1 = arith.constant 0 : i32
    return %c0_i32, %c0_i32_0 : i32, i32
  }
  func.func @transform_5(%arg0: i32) -> (i32, i32) {
    %c0_i32 = arith.constant 0 : i32
    %c0_i32_0 = arith.constant 0 : i32
    %c0_i32_1 = arith.constant 0 : i32
    return %c0_i32, %c0_i32_0 : i32, i32
  }
  func.func @transform_6(%arg0: i32) -> (i32, i32) {
    %c0_i32 = arith.constant 0 : i32
    %c0_i32_0 = arith.constant 0 : i32
    %c0_i32_1 = arith.constant 0 : i32
    return %c0_i32, %c0_i32_0 : i32, i32
  }
  func.func @transform_7(%arg0: i32) -> (i32, i32) {
    %c0_i32 = arith.constant 0 : i32
    %c0_i32_0 = arith.constant 0 : i32
    %c0_i32_1 = arith.constant 0 : i32
    return %c0_i32, %c0_i32_0 : i32, i32
  }
  func.func @transform_8(%arg0: i32) -> (i32, i32) {
    %c0_i32 = arith.constant 0 : i32
    %c0_i32_0 = arith.constant 0 : i32
    %c0_i32_1 = arith.constant 0 : i32
    return %c0_i32, %c0_i32_0 : i32, i32
  }
  func.func @transform_9(%arg0: i32) -> (i32, i32) {
    %c0_i32 = arith.constant 0 : i32
    %c0_i32_0 = arith.constant 0 : i32
    %c0_i32_1 = arith.constant 0 : i32
    return %c0_i32, %c0_i32_0 : i32, i32
  }
  func.func @transform_10(%arg0: i32) -> (i32, i32) {
    %c0_i32 = arith.constant 0 : i32
    %c0_i32_0 = arith.constant 0 : i32
    %c0_i32_1 = arith.constant 0 : i32
    return %c0_i32, %c0_i32_0 : i32, i32
  }
  func.func @transform_11(%arg0: i32) -> (i32, i32) {
    %c0_i32 = arith.constant 0 : i32
    %c0_i32_0 = arith.constant 0 : i32
    %c0_i32_1 = arith.constant 0 : i32
    return %c0_i32, %c0_i32_0 : i32, i32
  }
  func.func @transform_12(%arg0: i32) -> (i32, i32) {
    %c0_i32 = arith.constant 0 : i32
    %c0_i32_0 = arith.constant 0 : i32
    %c0_i32_1 = arith.constant 0 : i32
    return %c0_i32, %c0_i32_0 : i32, i32
  }
  func.func @transform_13(%arg0: i32) -> (i32, i32) {
    %c0_i32 = arith.constant 0 : i32
    %c0_i32_0 = arith.constant 0 : i32
    return %arg0, %c0_i32 : i32, i32
  }
}

</mosaic_0001>

<llo_original>
// kernel: tpu_custom_call.1
$region0: #{tpu_custom_call.1}
  #allocation0 [shape = 'u32[]', space=smem, size = 0x4, offset = 0x4, fixed_abs, tag = 'smem constant byte address 0x4 - core index']
  #allocation1 [shape = 'u32[144,128]{1,0:T(1,128)}', space=vmem, size = 0x12000, scoped, tag = 'internal scratch']
  %s0 = inlined_call_operand.vmem [shape: bf16[32,73], index: 0, kind: input, shape index: {}]
  %s1 = inlined_call_operand.vmem [shape: f32[73,32], index: 1, kind: input, shape index: {}]
  %s2 = inlined_call_operand.vmem [shape: f32[1,32], index: 2, kind: input, shape index: {}]
  %s3 = inlined_call_operand.vmem [shape: f32[32,32], index: 3, kind: input, shape index: {}]
  %s4 = inlined_call_operand.vmem [shape: f32[1,32], index: 4, kind: input, shape index: {}]
  %s5 = inlined_call_operand.vmem [shape: f32[32,32], index: 5, kind: input, shape index: {}]
  %s6 = inlined_call_operand.hbm [shape: f32[1,32], index: 6, kind: input, shape index: {}]
  %s7 = inlined_call_operand.vmem [shape: f32[32,32], index: 7, kind: input, shape index: {}]
  %s8 = inlined_call_operand.hbm [shape: f32[1,32], index: 8, kind: input, shape index: {}]
  %s9 = inlined_call_operand.vmem [shape: f32[32,32], index: 9, kind: input, shape index: {}]
  %s10 = inlined_call_operand.vmem [shape: f32[1,32], index: 10, kind: input, shape index: {}]
  %s11 = inlined_call_operand.vmem [shape: f32[32,6], index: 11, kind: input, shape index: {}]
  %s12 = inlined_call_operand.vmem [shape: f32[1,6], index: 12, kind: input, shape index: {}]
  %s13 = inlined_call_operand.vmem [shape: f32[32,6], index: 13, kind: output, shape index: {}]
  %s14 = sld [smem:[#allocation0]]
  $region70: #{tpu_custom_call.1} parent=0
    _
  %s16 = ssub.s32 1, %s14
  %s17 = scalar_select 0, %s16, %s14
  $region1: #{tpu_custom_call.1} parent=0
    #allocation2 [shape = 'u8[512]{0}', space=vmem, size = 0x400, scoped, tag = 'input window, operand 6, single buffered']
    #allocation3 [shape = 's32[1]{0}', space=sflag, size = 0x4, scoped, tag = 'scoped memory for tpu_custom_call.1']
    #allocation4 [shape = 'u8[512]{0}', space=vmem, size = 0x400, scoped, tag = 'input window, operand 8, single buffered']
    #allocation5 [shape = 's32[1]{0}', space=sflag, size = 0x4, scoped, tag = 'scoped memory for tpu_custom_call.1']
    %18 = vsyncpa [#allocation3], 0
    %19 = vsyncpa [#allocation5], 0
    // Predicated region
    $region2: #{tpu_custom_call.1} parent=1 // pred_check
      _
    $region3: #{tpu_custom_call.1} parent=1 // pred_check_branch
      %21 = sbr.rel (0) target = $region5
    $region4: #{tpu_custom_call.1} parent=1 // pred_region
      _
    $region5: #{tpu_custom_call.1} parent=1 // pred_fallthru
      _
    // Predicated region
    $region6: #{tpu_custom_call.1} parent=1 // pred_check
      _
    $region7: #{tpu_custom_call.1} parent=1 // pred_check_branch
      %23 = sbr.rel (0) target = $region9
    $region8: #{tpu_custom_call.1} parent=1 // pred_region
      _
    $region9: #{tpu_custom_call.1} parent=1 // pred_fallthru
      _
    // Predicated region
    $region10: #{tpu_custom_call.1} parent=1 // pred_check
      _
    $region11: #{tpu_custom_call.1} parent=1 // pred_check_branch
      %25 = sbr.rel (0) target = $region13
    $region12: #{tpu_custom_call.1} parent=1 // pred_region
      _
    $region13: #{tpu_custom_call.1} parent=1 // pred_fallthru
      _
    // Predicated region
    $region14: #{tpu_custom_call.1} parent=1 // pred_check
      _
    $region15: #{tpu_custom_call.1} parent=1 // pred_check_branch
      %27 = sbr.rel (0) target = $region17
    $region16: #{tpu_custom_call.1} parent=1 // pred_region
      _
    $region17: #{tpu_custom_call.1} parent=1 // pred_fallthru
      _
    // Predicated region
    $region18: #{tpu_custom_call.1} parent=1 // pred_check
      _
    $region19: #{tpu_custom_call.1} parent=1 // pred_check_branch
      %29 = sbr.rel (0) target = $region21
    $region20: #{tpu_custom_call.1} parent=1 // pred_region
      _
    $region21: #{tpu_custom_call.1} parent=1 // pred_fallthru
      _
    // Predicated region
    $region22: #{tpu_custom_call.1} parent=1 // pred_check
      _
    $region23: #{tpu_custom_call.1} parent=1 // pred_check_branch
      %31 = sbr.rel (0) target = $region25
    $region24: #{tpu_custom_call.1} parent=1 // pred_region
      _
    $region25: #{tpu_custom_call.1} parent=1 // pred_fallthru
      _
    // Predicated region
    $region26: #{tpu_custom_call.1} parent=1 // pred_check
      _
    $region27: #{tpu_custom_call.1} parent=1 // pred_check_branch
      %33 = sbr.rel (0) target = $region29
    $region28: #{tpu_custom_call.1} parent=1 // pred_region
      %s35 = ssub.s32 16, 16
      %36 = vsyncadd [#allocation3], %s35
      %s38 = sshll.u32 [#allocation2], 4
      %s39 = int_to_ptr.vmem [resolvable:$true] %s38
      %41 = dma.hbm_to_vmem [thread:$0]  %s6, 16, %s39, [#allocation3]
    $region29: #{tpu_custom_call.1} parent=1 // pred_fallthru
      _
    // Predicated region
    $region30: #{tpu_custom_call.1} parent=1 // pred_check
      _
    $region31: #{tpu_custom_call.1} parent=1 // pred_check_branch
      %43 = sbr.rel (0) target = $region33
    $region32: #{tpu_custom_call.1} parent=1 // pred_region
      _
    $region33: #{tpu_custom_call.1} parent=1 // pred_fallthru
      _
    // Predicated region
    $region34: #{tpu_custom_call.1} parent=1 // pred_check
      _
    $region35: #{tpu_custom_call.1} parent=1 // pred_check_branch
      %45 = sbr.rel (0) target = $region37
    $region36: #{tpu_custom_call.1} parent=1 // pred_region
      %s47 = ssub.s32 16, 16
      %48 = vsyncadd [#allocation5], %s47
      %s50 = sshll.u32 [#allocation4], 4
      %s51 = int_to_ptr.vmem [resolvable:$true] %s50
      %53 = dma.hbm_to_vmem [thread:$0]  %s8, 16, %s51, [#allocation5]
    $region37: #{tpu_custom_call.1} parent=1 // pred_fallthru
      _
    // Predicated region
    $region38: #{tpu_custom_call.1} parent=1 // pred_check
      _
    $region39: #{tpu_custom_call.1} parent=1 // pred_check_branch
      %55 = sbr.rel (0) target = $region41
    $region40: #{tpu_custom_call.1} parent=1 // pred_region
      _
    $region41: #{tpu_custom_call.1} parent=1 // pred_fallthru
      _
    // Predicated region
    $region42: #{tpu_custom_call.1} parent=1 // pred_check
      _
    $region43: #{tpu_custom_call.1} parent=1 // pred_check_branch
      %57 = sbr.rel (0) target = $region45
    $region44: #{tpu_custom_call.1} parent=1 // pred_region
      _
    $region45: #{tpu_custom_call.1} parent=1 // pred_fallthru
      _
    // Predicated region
    $region46: #{tpu_custom_call.1} parent=1 // pred_check
      _
    $region47: #{tpu_custom_call.1} parent=1 // pred_check_branch
      %59 = sbr.rel (0) target = $region49
    $region48: #{tpu_custom_call.1} parent=1 // pred_region
      _
    $region49: #{tpu_custom_call.1} parent=1 // pred_fallthru
      _
    // Predicated region
    $region50: #{tpu_custom_call.1} parent=1 // pred_check
      _
    $region51: #{tpu_custom_call.1} parent=1 // pred_check_branch
      %61 = sbr.rel (0) target = $region53
    $region52: #{tpu_custom_call.1} parent=1 // pred_region
      _
    $region53: #{tpu_custom_call.1} parent=1 // pred_fallthru
      _
    // Predicated region
    $region54: #{tpu_custom_call.1} parent=1 // pred_check
      _
    $region55: #{tpu_custom_call.1} parent=1 // pred_check_branch
      %63 = sbr.rel (0) target = $region57
    $region56: #{tpu_custom_call.1} parent=1 // pred_region
      %64 = dma.done [#allocation3], 16
    $region57: #{tpu_custom_call.1} parent=1 // pred_fallthru
      _
    // Predicated region
    $region58: #{tpu_custom_call.1} parent=1 // pred_check
      _
    $region59: #{tpu_custom_call.1} parent=1 // pred_check_branch
      %66 = sbr.rel (0) target = $region61
    $region60: #{tpu_custom_call.1} parent=1 // pred_region
      %67 = dma.done [#allocation5], 16
    $region61: #{tpu_custom_call.1} parent=1 // pred_fallthru
      _
    %v68 = vld [vmem:[%s0] sm:$0xf]
    %v69 = vld [vmem:[%s0 + $0x4] sm:$0xf]
    %v70 = vld [vmem:[%s0 + $0x8] sm:$0xf]
    %v71 = vld [vmem:[%s0 + $0xc] sm:$0xf]
    %v72 = vunpack.c.l.bf16 %v68
    %v73 = vunpack.c.l.bf16 %v69
    %v74 = vunpack.c.l.bf16 %v70
    %v75 = vunpack.c.l.bf16 %v71
    %v76 = vld [vmem:[%s1] sm:$0xff]
    %v77 = vld [vmem:[%s1 + $0x8] sm:$0xff]
    %v78 = vld [vmem:[%s1 + $0x10] sm:$0xff]
    %v79 = vld [vmem:[%s1 + $0x18] sm:$0xff]
    %v80 = vld [vmem:[%s1 + $0x20] sm:$0xff]
    %v81 = vld [vmem:[%s1 + $0x28] sm:$0xff]
    %v82 = vld [vmem:[%s1 + $0x30] sm:$0xff]
    %v83 = vld [vmem:[%s1 + $0x38] sm:$0xff]
    %v84 = vld [vmem:[%s1 + $0x40] sm:$0xff]
    %v85 = vld [vmem:[%s1 + $0x48] sm:$0x1]
    %v86 = vld [vmem:[%s2] sm:$0x1]
    %v88 = vlaneseq
    %v89 = vshrl.u32 %v88, 7
    %v90 = vsub.s32 0, %v89
    %v91 = vrot.slane %v86, %v90
    %vm93 = vcmask 596992
    %v95 = vsel %vm93, %v72, 0
    %v98 = vsel %vm93, %v73, 0
    %v101 = vsel %vm93, %v74, 0
    %v104 = vsel %vm93, %v75, 0
    %vm106 = vcmask 1040384
    %v108 = vsel %vm106, %v85, 0
    %110 = vmatprep.subr.mxu0 0.0
    %111 = vmatpush1.msra.mxu0 %v76
    %112 = vmatprep.subr.mxu0 0.0
    %113 = vmatpush1.msra.mxu0 %v77
    %114 = vmatprep.subr.mxu0 0.0
    %115 = vmatpush1.msra.mxu0 %v78
    %116 = vmatprep.subr.mxu0 0.0
    %117 = vmatpush1.msra.mxu0 %v79
    %118 = vmatprep.subr.mxu0 0.0
    %119 = vmatpush1.msra.mxu0 %v80
    %120 = vmatprep.subr.mxu0 0.0
    %121 = vmatpush1.msra.mxu0 %v81
    %122 = vmatprep.subr.mxu0 0.0
    %123 = vmatpush1.msra.mxu0 %v82
    %124 = vmatprep.subr.mxu0 0.0
    %125 = vmatpush1.msra.mxu0 %v83
    %126 = vmatprep.subr.mxu0 0.0
    %127 = vmatpush1.msra.mxu0 %v84
    %128 = vmatprep.subr.mxu0 0.0
    %129 = vmatpush1.msra.mxu0 %v108
    %130 = vmatprep.subr.mxu0 0.0
    %131 = vmatpush1.msra.mxu0 0.0
    %132 = vmatprep.subr.mxu0 0.0
    %133 = vmatpush1.msra.mxu0 0.0
    %134 = vmatprep.subr.mxu0 0.0
    %135 = vmatpush1.msra.mxu0 0.0
    %136 = vmatprep.subr.mxu0 0.0
    %137 = vmatpush1.msra.mxu0 0.0
    %138 = vmatprep.subr.mxu0 0.0
    %139 = vmatpush1.msra.mxu0 0.0
    %140 = vmatprep.subr.mxu0 0.0
    %141 = vmatpush1.msra.mxu0 0.0
    %142 = vmatprep.subr.mxu0 0.0
    %143 = vmatpush1.msra.mxu0 0.0
    %144 = vmatprep.subr.mxu0 0.0
    %145 = vmatpush1.msra.mxu0 0.0
    %146 = vmatprep.subr.mxu0 0.0
    %147 = vmatpush1.msra.mxu0 0.0
    %148 = vmatprep.subr.mxu0 0.0
    %149 = vmatpush1.msra.mxu0 0.0
    %150 = vmatprep.subr.mxu0 0.0
    %151 = vmatpush1.msra.mxu0 0.0
    %152 = vmatprep.subr.mxu0 0.0
    %153 = vmatpush1.msra.mxu0 0.0
    %154 = vmatprep.subr.mxu0 0.0
    %155 = vmatpush1.msra.mxu0 0.0
    %156 = vmatprep.subr.mxu0 0.0
    %157 = vmatpush1.msra.mxu0 0.0
    %158 = vmatprep.subr.mxu0 0.0
    %159 = vmatpush1.msra.mxu0 0.0
    %160 = vmatprep.subr.mxu0 0.0
    %161 = vmatpush1.msra.mxu0 0.0
    %162 = vmatprep.subr.mxu0 0.0
    %163 = vmatpush1.msra.mxu0 0.0
    %164 = vmatprep.subr.mxu0 0.0
    %165 = vmatpush1.msra.mxu0 0.0
    %166 = vmatprep.subr.mxu0 0.0
    %167 = vmatpush1.msra.mxu0 0.0
    %168 = vmatprep.subr.mxu0 0.0
    %169 = vmatpush1.msra.mxu0 0.0
    %170 = vmatprep.subr.mxu0 0.0
    %171 = vmatpush1.msra.mxu0 0.0
    %172 = vmatprep.subr.mxu0 0.0
    %173 = vmatpush1.msra.mxu0 0.0
    %174 = vmatprep.mubr.f32.mxu0 0.0
    %175 = vmatmul.mubr.f32.gmra.mrb[0].mxu0 %v95
    %v176 = vpop.f32.mrb[0].mxu0
    %v177 = vadd.f32 %v91, %v176
    %v178 = vpop.f32.mrb[0].mxu0
    %179 = vmatprep.mubr.f32.mxu0 0.0
    %180 = vmatmul.mubr.f32.gmra.mrb[0].mxu0 %v98
    %v181 = vpop.f32.mrb[0].mxu0
    %v182 = vadd.f32 %v91, %v181
    %v183 = vpop.f32.mrb[0].mxu0
    %184 = vmatprep.mubr.f32.mxu0 0.0
    %185 = vmatmul.mubr.f32.gmra.mrb[0].mxu0 %v101
    %v186 = vpop.f32.mrb[0].mxu0
    %v187 = vadd.f32 %v91, %v186
    %v188 = vpop.f32.mrb[0].mxu0
    %189 = vmatprep.mubr.f32.mxu0 0.0
    %190 = vmatmul.mubr.f32.gmra.mrb[0].mxu0 %v104
    %v191 = vpop.f32.mrb[0].mxu0
    %v192 = vadd.f32 %v91, %v191
    %v193 = vpop.f32.mrb[0].mxu0
    %194 = vdwg.mxu0
    %v195 = vmax.f32 %v177, 0.0
    %v196 = vmax.f32 %v182, 0.0
    %v197 = vmax.f32 %v187, 0.0
    %v198 = vmax.f32 %v192, 0.0
    %v199 = vld [vmem:[%s3] sm:$0xff]
    %v200 = vld [vmem:[%s3 + $0x8] sm:$0xff]
    %v201 = vld [vmem:[%s3 + $0x10] sm:$0xff]
    %v202 = vld [vmem:[%s3 + $0x18] sm:$0xff]
    %v203 = vld [vmem:[%s4] sm:$0x1]
    %v205 = vlaneseq
    %v206 = vshrl.u32 %v205, 7
    %v207 = vsub.s32 0, %v206
    %v208 = vrot.slane %v203, %v207
    %vm210 = vcmask 261120
    %v212 = vsel %vm210, %v195, 0
    %v215 = vsel %vm210, %v196, 0
    %v218 = vsel %vm210, %v197, 0
    %v221 = vsel %vm210, %v198, 0
    %223 = vmatprep.subr.mxu0 0.0
    %224 = vmatpush1.msra.mxu0 %v199
    %225 = vmatprep.subr.mxu0 0.0
    %226 = vmatpush1.msra.mxu0 %v200
    %227 = vmatprep.subr.mxu0 0.0
    %228 = vmatpush1.msra.mxu0 %v201
    %229 = vmatprep.subr.mxu0 0.0
    %230 = vmatpush1.msra.mxu0 %v202
    %231 = vmatprep.subr.mxu0 0.0
    %232 = vmatpush1.msra.mxu0 0.0
    %233 = vmatprep.subr.mxu0 0.0
    %234 = vmatpush1.msra.mxu0 0.0
    %235 = vmatprep.subr.mxu0 0.0
    %236 = vmatpush1.msra.mxu0 0.0
    %237 = vmatprep.subr.mxu0 0.0
    %238 = vmatpush1.msra.mxu0 0.0
    %239 = vmatprep.subr.mxu0 0.0
    %240 = vmatpush1.msra.mxu0 0.0
    %241 = vmatprep.subr.mxu0 0.0
    %242 = vmatpush1.msra.mxu0 0.0
    %243 = vmatprep.subr.mxu0 0.0
    %244 = vmatpush1.msra.mxu0 0.0
    %245 = vmatprep.subr.mxu0 0.0
    %246 = vmatpush1.msra.mxu0 0.0
    %247 = vmatprep.subr.mxu0 0.0
    %248 = vmatpush1.msra.mxu0 0.0
    %249 = vmatprep.subr.mxu0 0.0
    %250 = vmatpush1.msra.mxu0 0.0
    %251 = vmatprep.subr.mxu0 0.0
    %252 = vmatpush1.msra.mxu0 0.0
    %253 = vmatprep.subr.mxu0 0.0
    %254 = vmatpush1.msra.mxu0 0.0
    %255 = vmatprep.subr.mxu0 0.0
    %256 = vmatpush1.msra.mxu0 0.0
    %257 = vmatprep.subr.mxu0 0.0
    %258 = vmatpush1.msra.mxu0 0.0
    %259 = vmatprep.subr.mxu0 0.0
    %260 = vmatpush1.msra.mxu0 0.0
    %261 = vmatprep.subr.mxu0 0.0
    %262 = vmatpush1.msra.mxu0 0.0
    %263 = vmatprep.subr.mxu0 0.0
    %264 = vmatpush1.msra.mxu0 0.0
    %265 = vmatprep.subr.mxu0 0.0
    %266 = vmatpush1.msra.mxu0 0.0
    %267 = vmatprep.subr.mxu0 0.0
    %268 = vmatpush1.msra.mxu0 0.0
    %269 = vmatprep.subr.mxu0 0.0
    %270 = vmatpush1.msra.mxu0 0.0
    %271 = vmatprep.subr.mxu0 0.0
    %272 = vmatpush1.msra.mxu0 0.0
    %273 = vmatprep.subr.mxu0 0.0
    %274 = vmatpush1.msra.mxu0 0.0
    %275 = vmatprep.subr.mxu0 0.0
    %276 = vmatpush1.msra.mxu0 0.0
    %277 = vmatprep.subr.mxu0 0.0
    %278 = vmatpush1.msra.mxu0 0.0
    %279 = vmatprep.subr.mxu0 0.0
    %280 = vmatpush1.msra.mxu0 0.0
    %281 = vmatprep.subr.mxu0 0.0
    %282 = vmatpush1.msra.mxu0 0.0
    %283 = vmatprep.subr.mxu0 0.0
    %284 = vmatpush1.msra.mxu0 0.0
    %285 = vmatprep.subr.mxu0 0.0
    %286 = vmatpush1.msra.mxu0 0.0
    %287 = vmatprep.mubr.f32.mxu0 0.0
    %288 = vmatmul.mubr.f32.gmra.mrb[0].mxu0 %v212
    %v289 = vpop.f32.mrb[0].mxu0
    %v290 = vadd.f32 %v208, %v289
    %v291 = vpop.f32.mrb[0].mxu0
    %292 = vmatprep.mubr.f32.mxu0 0.0
    %293 = vmatmul.mubr.f32.gmra.mrb[0].mxu0 %v215
    %v294 = vpop.f32.mrb[0].mxu0
    %v295 = vadd.f32 %v208, %v294
    %v296 = vpop.f32.mrb[0].mxu0
    %297 = vmatprep.mubr.f32.mxu0 0.0
    %298 = vmatmul.mubr.f32.gmra.mrb[0].mxu0 %v218
    %v299 = vpop.f32.mrb[0].mxu0
    %v300 = vadd.f32 %v208, %v299
    %v301 = vpop.f32.mrb[0].mxu0
    %302 = vmatprep.mubr.f32.mxu0 0.0
    %303 = vmatmul.mubr.f32.gmra.mrb[0].mxu0 %v221
    %v304 = vpop.f32.mrb[0].mxu0
    %v305 = vadd.f32 %v208, %v304
    %v306 = vpop.f32.mrb[0].mxu0
    %307 = vdwg.mxu0
    %v308 = vld [vmem:[%s5] sm:$0xff]
    %v309 = vld [vmem:[%s5 + $0x8] sm:$0xff]
    %v310 = vld [vmem:[%s5 + $0x10] sm:$0xff]
    %v311 = vld [vmem:[%s5 + $0x18] sm:$0xff]
    %v312 = vld [vmem:[#allocation2] sm:$0x1]
    %v314 = vlaneseq
    %v315 = vshrl.u32 %v314, 7
    %v316 = vsub.s32 0, %v315
    %v317 = vrot.slane %v312, %v316
    %v320 = vsel %vm210, %v290, 0
    %v323 = vsel %vm210, %v295, 0
    %v326 = vsel %vm210, %v300, 0
    %v329 = vsel %vm210, %v305, 0
    %331 = vmatprep.subr.mxu0 0.0
    %332 = vmatpush1.msra.mxu0 %v308
    %333 = vmatprep.subr.mxu0 0.0
    %334 = vmatpush1.msra.mxu0 %v309
    %335 = vmatprep.subr.mxu0 0.0
    %336 = vmatpush1.msra.mxu0 %v310
    %337 = vmatprep.subr.mxu0 0.0
    %338 = vmatpush1.msra.mxu0 %v311
    %339 = vmatprep.subr.mxu0 0.0
    %340 = vmatpush1.msra.mxu0 0.0
    %341 = vmatprep.subr.mxu0 0.0
    %342 = vmatpush1.msra.mxu0 0.0
    %343 = vmatprep.subr.mxu0 0.0
    %344 = vmatpush1.msra.mxu0 0.0
    %345 = vmatprep.subr.mxu0 0.0
    %346 = vmatpush1.msra.mxu0 0.0
    %347 = vmatprep.subr.mxu0 0.0
    %348 = vmatpush1.msra.mxu0 0.0
    %349 = vmatprep.subr.mxu0 0.0
    %350 = vmatpush1.msra.mxu0 0.0
    %351 = vmatprep.subr.mxu0 0.0
    %352 = vmatpush1.msra.mxu0 0.0
    %353 = vmatprep.subr.mxu0 0.0
    %354 = vmatpush1.msra.mxu0 0.0
    %355 = vmatprep.subr.mxu0 0.0
    %356 = vmatpush1.msra.mxu0 0.0
    %357 = vmatprep.subr.mxu0 0.0
    %358 = vmatpush1.msra.mxu0 0.0
    %359 = vmatprep.subr.mxu0 0.0
    %360 = vmatpush1.msra.mxu0 0.0
    %361 = vmatprep.subr.mxu0 0.0
    %362 = vmatpush1.msra.mxu0 0.0
    %363 = vmatprep.subr.mxu0 0.0
    %364 = vmatpush1.msra.mxu0 0.0
    %365 = vmatprep.subr.mxu0 0.0
    %366 = vmatpush1.msra.mxu0 0.0
    %367 = vmatprep.subr.mxu0 0.0
    %368 = vmatpush1.msra.mxu0 0.0
    %369 = vmatprep.subr.mxu0 0.0
    %370 = vmatpush1.msra.mxu0 0.0
    %371 = vmatprep.subr.mxu0 0.0
    %372 = vmatpush1.msra.mxu0 0.0
    %373 = vmatprep.subr.mxu0 0.0
    %374 = vmatpush1.msra.mxu0 0.0
    %375 = vmatprep.subr.mxu0 0.0
    %376 = vmatpush1.msra.mxu0 0.0
    %377 = vmatprep.subr.mxu0 0.0
    %378 = vmatpush1.msra.mxu0 0.0
    %379 = vmatprep.subr.mxu0 0.0
    %380 = vmatpush1.msra.mxu0 0.0
    %381 = vmatprep.subr.mxu0 0.0
    %382 = vmatpush1.msra.mxu0 0.0
    %383 = vmatprep.subr.mxu0 0.0
    %384 = vmatpush1.msra.mxu0 0.0
    %385 = vmatprep.subr.mxu0 0.0
    %386 = vmatpush1.msra.mxu0 0.0
    %387 = vmatprep.subr.mxu0 0.0
    %388 = vmatpush1.msra.mxu0 0.0
    %389 = vmatprep.subr.mxu0 0.0
    %390 = vmatpush1.msra.mxu0 0.0
    %391 = vmatprep.subr.mxu0 0.0
    %392 = vmatpush1.msra.mxu0 0.0
    %393 = vmatprep.subr.mxu0 0.0
    %394 = vmatpush1.msra.mxu0 0.0
    %395 = vmatprep.mubr.f32.mxu0 0.0
    %396 = vmatmul.mubr.f32.gmra.mrb[0].mxu0 %v320
    %v397 = vpop.f32.mrb[0].mxu0
    %v398 = vadd.f32 %v317, %v397
    %v399 = vpop.f32.mrb[0].mxu0
    %400 = vmatprep.mubr.f32.mxu0 0.0
    %401 = vmatmul.mubr.f32.gmra.mrb[0].mxu0 %v323
    %v402 = vpop.f32.mrb[0].mxu0
    %v403 = vadd.f32 %v317, %v402
    %v404 = vpop.f32.mrb[0].mxu0
    %405 = vmatprep.mubr.f32.mxu0 0.0
    %406 = vmatmul.mubr.f32.gmra.mrb[0].mxu0 %v326
    %v407 = vpop.f32.mrb[0].mxu0
    %v408 = vadd.f32 %v317, %v407
    %v409 = vpop.f32.mrb[0].mxu0
    %410 = vmatprep.mubr.f32.mxu0 0.0
    %411 = vmatmul.mubr.f32.gmra.mrb[0].mxu0 %v329
    %v412 = vpop.f32.mrb[0].mxu0
    %v413 = vadd.f32 %v317, %v412
    %v414 = vpop.f32.mrb[0].mxu0
    %415 = vdwg.mxu0
    %v416 = vmax.f32 %v398, 0.0
    %v417 = vmax.f32 %v403, 0.0
    %v418 = vmax.f32 %v408, 0.0
    %v419 = vmax.f32 %v413, 0.0
    %v420 = vld [vmem:[%s7] sm:$0xff]
    %v421 = vld [vmem:[%s7 + $0x8] sm:$0xff]
    %v422 = vld [vmem:[%s7 + $0x10] sm:$0xff]
    %v423 = vld [vmem:[%s7 + $0x18] sm:$0xff]
    %v424 = vld [vmem:[#allocation4] sm:$0x1]
    %v426 = vlaneseq
    %v427 = vshrl.u32 %v426, 7
    %v428 = vsub.s32 0, %v427
    %v429 = vrot.slane %v424, %v428
    %v432 = vsel %vm210, %v416, 0
    %v435 = vsel %vm210, %v417, 0
    %v438 = vsel %vm210, %v418, 0
    %v441 = vsel %vm210, %v419, 0
    %443 = vmatprep.subr.mxu0 0.0
    %444 = vmatpush1.msra.mxu0 %v420
    %445 = vmatprep.subr.mxu0 0.0
    %446 = vmatpush1.msra.mxu0 %v421
    %447 = vmatprep.subr.mxu0 0.0
    %448 = vmatpush1.msra.mxu0 %v422
    %449 = vmatprep.subr.mxu0 0.0
    %450 = vmatpush1.msra.mxu0 %v423
    %451 = vmatprep.subr.mxu0 0.0
    %452 = vmatpush1.msra.mxu0 0.0
    %453 = vmatprep.subr.mxu0 0.0
    %454 = vmatpush1.msra.mxu0 0.0
    %455 = vmatprep.subr.mxu0 0.0
    %456 = vmatpush1.msra.mxu0 0.0
    %457 = vmatprep.subr.mxu0 0.0
    %458 = vmatpush1.msra.mxu0 0.0
    %459 = vmatprep.subr.mxu0 0.0
    %460 = vmatpush1.msra.mxu0 0.0
    %461 = vmatprep.subr.mxu0 0.0
    %462 = vmatpush1.msra.mxu0 0.0
    %463 = vmatprep.subr.mxu0 0.0
    %464 = vmatpush1.msra.mxu0 0.0
    %465 = vmatprep.subr.mxu0 0.0
    %466 = vmatpush1.msra.mxu0 0.0
    %467 = vmatprep.subr.mxu0 0.0
    %468 = vmatpush1.msra.mxu0 0.0
    %469 = vmatprep.subr.mxu0 0.0
    %470 = vmatpush1.msra.mxu0 0.0
    %471 = vmatprep.subr.mxu0 0.0
    %472 = vmatpush1.msra.mxu0 0.0
    %473 = vmatprep.subr.mxu0 0.0
    %474 = vmatpush1.msra.mxu0 0.0
    %475 = vmatprep.subr.mxu0 0.0
    %476 = vmatpush1.msra.mxu0 0.0
    %477 = vmatprep.subr.mxu0 0.0
    %478 = vmatpush1.msra.mxu0 0.0
    %479 = vmatprep.subr.mxu0 0.0
    %480 = vmatpush1.msra.mxu0 0.0
    %481 = vmatprep.subr.mxu0 0.0
    %482 = vmatpush1.msra.mxu0 0.0
    %483 = vmatprep.subr.mxu0 0.0
    %484 = vmatpush1.msra.mxu0 0.0
    %485 = vmatprep.subr.mxu0 0.0
    %486 = vmatpush1.msra.mxu0 0.0
    %487 = vmatprep.subr.mxu0 0.0
    %488 = vmatpush1.msra.mxu0 0.0
    %489 = vmatprep.subr.mxu0 0.0
    %490 = vmatpush1.msra.mxu0 0.0
    %491 = vmatprep.subr.mxu0 0.0
    %492 = vmatpush1.msra.mxu0 0.0
    %493 = vmatprep.subr.mxu0 0.0
    %494 = vmatpush1.msra.mxu0 0.0
    %495 = vmatprep.subr.mxu0 0.0
    %496 = vmatpush1.msra.mxu0 0.0
    %497 = vmatprep.subr.mxu0 0.0
    %498 = vmatpush1.msra.mxu0 0.0
    %499 = vmatprep.subr.mxu0 0.0
    %500 = vmatpush1.msra.mxu0 0.0
    %501 = vmatprep.subr.mxu0 0.0
    %502 = vmatpush1.msra.mxu0 0.0
    %503 = vmatprep.subr.mxu0 0.0
    %504 = vmatpush1.msra.mxu0 0.0
    %505 = vmatprep.subr.mxu0 0.0
    %506 = vmatpush1.msra.mxu0 0.0
    %507 = vmatprep.mubr.f32.mxu0 0.0
    %508 = vmatmul.mubr.f32.gmra.mrb[0].mxu0 %v432
    %v509 = vpop.f32.mrb[0].mxu0
    %v510 = vadd.f32 %v429, %v509
    %v511 = vpop.f32.mrb[0].mxu0
    %512 = vmatprep.mubr.f32.mxu0 0.0
    %513 = vmatmul.mubr.f32.gmra.mrb[0].mxu0 %v435
    %v514 = vpop.f32.mrb[0].mxu0
    %v515 = vadd.f32 %v429, %v514
    %v516 = vpop.f32.mrb[0].mxu0
    %517 = vmatprep.mubr.f32.mxu0 0.0
    %518 = vmatmul.mubr.f32.gmra.mrb[0].mxu0 %v438
    %v519 = vpop.f32.mrb[0].mxu0
    %v520 = vadd.f32 %v429, %v519
    %v521 = vpop.f32.mrb[0].mxu0
    %522 = vmatprep.mubr.f32.mxu0 0.0
    %523 = vmatmul.mubr.f32.gmra.mrb[0].mxu0 %v441
    %v524 = vpop.f32.mrb[0].mxu0
    %v525 = vadd.f32 %v429, %v524
    %v526 = vpop.f32.mrb[0].mxu0
    %527 = vdwg.mxu0
    %v528 = vld [vmem:[%s9] sm:$0xff]
    %v529 = vld [vmem:[%s9 + $0x8] sm:$0xff]
    %v530 = vld [vmem:[%s9 + $0x10] sm:$0xff]
    %v531 = vld [vmem:[%s9 + $0x18] sm:$0xff]
    %v532 = vld [vmem:[%s10] sm:$0x1]
    %v534 = vlaneseq
    %v535 = vshrl.u32 %v534, 7
    %v536 = vsub.s32 0, %v535
    %v537 = vrot.slane %v532, %v536
    %v540 = vsel %vm210, %v510, 0
    %v543 = vsel %vm210, %v515, 0
    %v546 = vsel %vm210, %v520, 0
    %v549 = vsel %vm210, %v525, 0
    %551 = vmatprep.subr.mxu0 0.0
    %552 = vmatpush1.msra.mxu0 %v528
    %553 = vmatprep.subr.mxu0 0.0
    %554 = vmatpush1.msra.mxu0 %v529
    %555 = vmatprep.subr.mxu0 0.0
    %556 = vmatpush1.msra.mxu0 %v530
    %557 = vmatprep.subr.mxu0 0.0
    %558 = vmatpush1.msra.mxu0 %v531
    %559 = vmatprep.subr.mxu0 0.0
    %560 = vmatpush1.msra.mxu0 0.0
    %561 = vmatprep.subr.mxu0 0.0
    %562 = vmatpush1.msra.mxu0 0.0
    %563 = vmatprep.subr.mxu0 0.0
    %564 = vmatpush1.msra.mxu0 0.0
    %565 = vmatprep.subr.mxu0 0.0
    %566 = vmatpush1.msra.mxu0 0.0
    %567 = vmatprep.subr.mxu0 0.0
    %568 = vmatpush1.msra.mxu0 0.0
    %569 = vmatprep.subr.mxu0 0.0
    %570 = vmatpush1.msra.mxu0 0.0
    %571 = vmatprep.subr.mxu0 0.0
    %572 = vmatpush1.msra.mxu0 0.0
    %573 = vmatprep.subr.mxu0 0.0
    %574 = vmatpush1.msra.mxu0 0.0
    %575 = vmatprep.subr.mxu0 0.0
    %576 = vmatpush1.msra.mxu0 0.0
    %577 = vmatprep.subr.mxu0 0.0
    %578 = vmatpush1.msra.mxu0 0.0
    %579 = vmatprep.subr.mxu0 0.0
    %580 = vmatpush1.msra.mxu0 0.0
    %581 = vmatprep.subr.mxu0 0.0
    %582 = vmatpush1.msra.mxu0 0.0
    %583 = vmatprep.subr.mxu0 0.0
    %584 = vmatpush1.msra.mxu0 0.0
    %585 = vmatprep.subr.mxu0 0.0
    %586 = vmatpush1.msra.mxu0 0.0
    %587 = vmatprep.subr.mxu0 0.0
    %588 = vmatpush1.msra.mxu0 0.0
    %589 = vmatprep.subr.mxu0 0.0
    %590 = vmatpush1.msra.mxu0 0.0
    %591 = vmatprep.subr.mxu0 0.0
    %592 = vmatpush1.msra.mxu0 0.0
    %593 = vmatprep.subr.mxu0 0.0
    %594 = vmatpush1.msra.mxu0 0.0
    %595 = vmatprep.subr.mxu0 0.0
    %596 = vmatpush1.msra.mxu0 0.0
    %597 = vmatprep.subr.mxu0 0.0
    %598 = vmatpush1.msra.mxu0 0.0
    %599 = vmatprep.subr.mxu0 0.0
    %600 = vmatpush1.msra.mxu0 0.0
    %601 = vmatprep.subr.mxu0 0.0
    %602 = vmatpush1.msra.mxu0 0.0
    %603 = vmatprep.subr.mxu0 0.0
    %604 = vmatpush1.msra.mxu0 0.0
    %605 = vmatprep.subr.mxu0 0.0
    %606 = vmatpush1.msra.mxu0 0.0
    %607 = vmatprep.subr.mxu0 0.0
    %608 = vmatpush1.msra.mxu0 0.0
    %609 = vmatprep.subr.mxu0 0.0
    %610 = vmatpush1.msra.mxu0 0.0
    %611 = vmatprep.subr.mxu0 0.0
    %612 = vmatpush1.msra.mxu0 0.0
    %613 = vmatprep.subr.mxu0 0.0
    %614 = vmatpush1.msra.mxu0 0.0
    %615 = vmatprep.mubr.f32.mxu0 0.0
    %616 = vmatmul.mubr.f32.gmra.mrb[0].mxu0 %v540
    %v617 = vpop.f32.mrb[0].mxu0
    %v618 = vadd.f32 %v537, %v617
    %v619 = vpop.f32.mrb[0].mxu0
    %620 = vmatprep.mubr.f32.mxu0 0.0
    %621 = vmatmul.mubr.f32.gmra.mrb[0].mxu0 %v543
    %v622 = vpop.f32.mrb[0].mxu0
    %v623 = vadd.f32 %v537, %v622
    %v624 = vpop.f32.mrb[0].mxu0
    %625 = vmatprep.mubr.f32.mxu0 0.0
    %626 = vmatmul.mubr.f32.gmra.mrb[0].mxu0 %v546
    %v627 = vpop.f32.mrb[0].mxu0
    %v628 = vadd.f32 %v537, %v627
    %v629 = vpop.f32.mrb[0].mxu0
    %630 = vmatprep.mubr.f32.mxu0 0.0
    %631 = vmatmul.mubr.f32.gmra.mrb[0].mxu0 %v549
    %v632 = vpop.f32.mrb[0].mxu0
    %v633 = vadd.f32 %v537, %v632
    %v634 = vpop.f32.mrb[0].mxu0
    %635 = vdwg.mxu0
    %v636 = vmax.f32 %v618, 0.0
    %v637 = vmax.f32 %v623, 0.0
    %v638 = vmax.f32 %v628, 0.0
    %v639 = vmax.f32 %v633, 0.0
    %v640 = vld [vmem:[%s11] sm:$0xff]
    %v641 = vld [vmem:[%s11 + $0x8] sm:$0xff]
    %v642 = vld [vmem:[%s11 + $0x10] sm:$0xff]
    %v643 = vld [vmem:[%s11 + $0x18] sm:$0xff]
    %v644 = vld [vmem:[%s12] sm:$0x1]
    %v646 = vlaneseq
    %v647 = vshrl.u32 %v646, 7
    %v648 = vsub.s32 0, %v647
    %v649 = vrot.slane %v644, %v648
    %v652 = vsel %vm210, %v636, 0
    %v655 = vsel %vm210, %v637, 0
    %v658 = vsel %vm210, %v638, 0
    %v661 = vsel %vm210, %v639, 0
    %663 = vmatprep.subr.mxu0 0.0
    %664 = vmatpush1.msra.mxu0 %v640
    %665 = vmatprep.subr.mxu0 0.0
    %666 = vmatpush1.msra.mxu0 %v641
    %667 = vmatprep.subr.mxu0 0.0
    %668 = vmatpush1.msra.mxu0 %v642
    %669 = vmatprep.subr.mxu0 0.0
    %670 = vmatpush1.msra.mxu0 %v643
    %671 = vmatprep.subr.mxu0 0.0
    %672 = vmatpush1.msra.mxu0 0.0
    %673 = vmatprep.subr.mxu0 0.0
    %674 = vmatpush1.msra.mxu0 0.0
    %675 = vmatprep.subr.mxu0 0.0
    %676 = vmatpush1.msra.mxu0 0.0
    %677 = vmatprep.subr.mxu0 0.0
    %678 = vmatpush1.msra.mxu0 0.0
    %679 = vmatprep.subr.mxu0 0.0
    %680 = vmatpush1.msra.mxu0 0.0
    %681 = vmatprep.subr.mxu0 0.0
    %682 = vmatpush1.msra.mxu0 0.0
    %683 = vmatprep.subr.mxu0 0.0
    %684 = vmatpush1.msra.mxu0 0.0
    %685 = vmatprep.subr.mxu0 0.0
    %686 = vmatpush1.msra.mxu0 0.0
    %687 = vmatprep.subr.mxu0 0.0
    %688 = vmatpush1.msra.mxu0 0.0
    %689 = vmatprep.subr.mxu0 0.0
    %690 = vmatpush1.msra.mxu0 0.0
    %691 = vmatprep.subr.mxu0 0.0
    %692 = vmatpush1.msra.mxu0 0.0
    %693 = vmatprep.subr.mxu0 0.0
    %694 = vmatpush1.msra.mxu0 0.0
    %695 = vmatprep.subr.mxu0 0.0
    %696 = vmatpush1.msra.mxu0 0.0
    %697 = vmatprep.subr.mxu0 0.0
    %698 = vmatpush1.msra.mxu0 0.0
    %699 = vmatprep.subr.mxu0 0.0
    %700 = vmatpush1.msra.mxu0 0.0
    %701 = vmatprep.subr.mxu0 0.0
    %702 = vmatpush1.msra.mxu0 0.0
    %703 = vmatprep.subr.mxu0 0.0
    %704 = vmatpush1.msra.mxu0 0.0
    %705 = vmatprep.subr.mxu0 0.0
    %706 = vmatpush1.msra.mxu0 0.0
    %707 = vmatprep.subr.mxu0 0.0
    %708 = vmatpush1.msra.mxu0 0.0
    %709 = vmatprep.subr.mxu0 0.0
    %710 = vmatpush1.msra.mxu0 0.0
    %711 = vmatprep.subr.mxu0 0.0
    %712 = vmatpush1.msra.mxu0 0.0
    %713 = vmatprep.subr.mxu0 0.0
    %714 = vmatpush1.msra.mxu0 0.0
    %715 = vmatprep.subr.mxu0 0.0
    %716 = vmatpush1.msra.mxu0 0.0
    %717 = vmatprep.subr.mxu0 0.0
    %718 = vmatpush1.msra.mxu0 0.0
    %719 = vmatprep.subr.mxu0 0.0
    %720 = vmatpush1.msra.mxu0 0.0
    %721 = vmatprep.subr.mxu0 0.0
    %722 = vmatpush1.msra.mxu0 0.0
    %723 = vmatprep.subr.mxu0 0.0
    %724 = vmatpush1.msra.mxu0 0.0
    %725 = vmatprep.subr.mxu0 0.0
    %726 = vmatpush1.msra.mxu0 0.0
    %727 = vmatprep.mubr.f32.mxu0 0.0
    %728 = vmatmul.mubr.f32.gmra.mrb[0].mxu0 %v652
    %v729 = vpop.f32.mrb[0].mxu0
    %v730 = vadd.f32 %v649, %v729
    %v731 = vpop.f32.mrb[0].mxu0
    %732 = vmatprep.mubr.f32.mxu0 0.0
    %733 = vmatmul.mubr.f32.gmra.mrb[0].mxu0 %v655
    %v734 = vpop.f32.mrb[0].mxu0
    %v735 = vadd.f32 %v649, %v734
    %v736 = vpop.f32.mrb[0].mxu0
    %737 = vmatprep.mubr.f32.mxu0 0.0
    %738 = vmatmul.mubr.f32.gmra.mrb[0].mxu0 %v658
    %v739 = vpop.f32.mrb[0].mxu0
    %v740 = vadd.f32 %v649, %v739
    %v741 = vpop.f32.mrb[0].mxu0
    %742 = vmatprep.mubr.f32.mxu0 0.0
    %743 = vmatmul.mubr.f32.gmra.mrb[0].mxu0 %v661
    %v744 = vpop.f32.mrb[0].mxu0
    %v745 = vadd.f32 %v649, %v744
    %v746 = vpop.f32.mrb[0].mxu0
    %747 = vdwg.mxu0
    %vm748 = vcmask 48128
    %749 = vst.msk [vmem:[%s13] sm:$0xff] %vm748, %v730
    %750 = vst.msk [vmem:[%s13 + $0x8] sm:$0xff] %vm748, %v735
    %751 = vst.msk [vmem:[%s13 + $0x10] sm:$0xff] %vm748, %v740
    %752 = vst.msk [vmem:[%s13 + $0x18] sm:$0xff] %vm748, %v745
    // Predicated region
    $region62: #{tpu_custom_call.1} parent=1 // pred_check
      _
    $region63: #{tpu_custom_call.1} parent=1 // pred_check_branch
      %754 = sbr.rel (0) target = $region65
    $region64: #{tpu_custom_call.1} parent=1 // pred_region
      _
    $region65: #{tpu_custom_call.1} parent=1 // pred_fallthru
      _
    // Predicated region
    $region66: #{tpu_custom_call.1} parent=1 // pred_check
      _
    $region67: #{tpu_custom_call.1} parent=1 // pred_check_branch
      %756 = sbr.rel (0) target = $region69
    $region68: #{tpu_custom_call.1} parent=1 // pred_region
      _
    $region69: #{tpu_custom_call.1} parent=1 // pred_fallthru
      _
    %757 = vsyncpa [#allocation3], 1
    %758 = vsyncpa [#allocation5], 1

</llo_original>
